<compile_context>
chip_gen: v6e
topology: v6e:2x2x1
jax: 0.10.0
libtpu: 0.0.40
codegen_flags: <defaults>
</compile_context>

<pallas_src>
import functools

import jax
import jax.numpy as jnp
from jax.experimental import pallas as pl
from jax.experimental.pallas import tpu as pltpu

NUM_BOND_TYPE = 6
NUM_BOND_DIRECTION = 3
BOND_FEATS = NUM_BOND_TYPE + NUM_BOND_DIRECTION  # 9

# Bond-feature contraction padded to a sublane multiple (16).  Padding all the way to 128
# would inflate the dense-branch HBM reads ~14x for a 9-wide feature, so 16 is used instead;
# the MLP contractions below are genuinely 128-multiples (D_pad, H_pad).
F_PAD = 16

TILE_ROWS = 1024   # max row tile: ~<=10 MiB VMEM incl. double buffering at D_pad<=640
BN_EPS = 1e-5


def _ru(x, m):
    return ((x + m - 1) // m) * m


# ----------------------------------------------------------------------------------
# Kernel 1: fused bond-encoder + message + relu          out = relu(x_src + feats @ W_T)
# ----------------------------------------------------------------------------------
def _bond_msg_idx_kernel(idx_ref, xsrc_ref, w_ref, o_ref):
    te = xsrc_ref.shape[0]
    idx = idx_ref[...]                                     # (TE, 2) int32
    a = idx[:, 0:1]                                        # bond type index
    b = idx[:, 1:2] + NUM_BOND_TYPE                        # shifted bond direction index
    lanes = jax.lax.broadcasted_iota(jnp.int32, (te, F_PAD), 1)
    # Disjoint index ranges -> sum of the two one-hots == concat'd one-hot.
    onehot = (lanes == a).astype(jnp.float32) + (lanes == b).astype(jnp.float32)
    emb = jnp.dot(onehot, w_ref[...], preferred_element_type=jnp.float32)
    o_ref[...] = jnp.maximum(xsrc_ref[...] + emb, 0.0)


def _bond_msg_dense_kernel(feat_ref, xsrc_ref, w_ref, o_ref):
    emb = jnp.dot(feat_ref[...], w_ref[...], preferred_element_type=jnp.float32)
    o_ref[...] = jnp.maximum(xsrc_ref[...] + emb, 0.0)


@jax.jit
def bond_message_relu(w_t_pad, x_src, edge_attr):
    """msg = relu(x_src + MixedBondEncoder(edge_attr)), row-tiled over edges.

    w_t_pad: (F_PAD, Dp) f32 resident weight (transposed + zero-padded).
    x_src:   (E, Dp) f32 gathered source-node features (already edge_weight-scaled if any).
    edge_attr: (E, 2) int indices  OR  (E, BOND_FEATS) float dense features.
    """
    e, dp = x_src.shape
    assert dp % 128 == 0 and w_t_pad.shape == (F_PAD, dp)

    te = min(TILE_ROWS, _ru(max(e, 1), 8))
    e_pad = _ru(e, te)
    x_src_p = jnp.pad(x_src, ((0, e_pad - e), (0, 0)))

    if edge_attr.shape[1] == 2:        # F.embedding branch (same shape test as the torch code)
        first = jnp.pad(edge_attr.astype(jnp.int32), ((0, e_pad - e), (0, 0)))
        first_spec = pl.BlockSpec((te, 2), lambda i: (i, 0))
        kernel = _bond_msg_idx_kernel
        in_bytes = e_pad * 2 * 4
    else:                              # nn.Linear branch on dense float features
        first = jnp.pad(edge_attr.astype(jnp.float32),
                        ((0, e_pad - e), (0, F_PAD - edge_attr.shape[1])))
        first_spec = pl.BlockSpec((te, F_PAD), lambda i: (i, 0))
        kernel = _bond_msg_dense_kernel
        in_bytes = e_pad * F_PAD * 4

    cost = pl.CostEstimate(
        flops=2 * e_pad * F_PAD * dp + 2 * e_pad * dp,
        transcendentals=0,
        bytes_accessed=in_bytes + 4 * (e_pad * dp + F_PAD * dp + e_pad * dp))

    out = pl.pallas_call(
        kernel,
        out_shape=jax.ShapeDtypeStruct((e_pad, dp), jnp.float32),
        grid_spec=pltpu.PrefetchScalarGridSpec(
            num_scalar_prefetch=0,
            grid=(e_pad // te,),
            in_specs=[first_spec,
                      pl.BlockSpec((te, dp), lambda i: (i, 0)),
                      pl.BlockSpec((F_PAD, dp), lambda i: (0, 0))],   # resident weight
            out_specs=pl.BlockSpec((te, dp), lambda i: (i, 0))),
        compiler_params=pltpu.CompilerParams(dimension_semantics=("parallel",)),
        cost_estimate=cost,
    )(first, x_src_p, w_t_pad)
    return out[:e]


# ----------------------------------------------------------------------------------
# Kernel 2: fused linear + folded-BatchNorm epilogue (+ optional ReLU)
#           out = maybe_relu((x @ W_T) * scale + shift)
# ----------------------------------------------------------------------------------
def _linear_bn_act_kernel(x_ref, w_ref, s_ref, t_ref, o_ref, *, relu):
    acc = jnp.dot(x_ref[...], w_ref[...], preferred_element_type=jnp.float32)
    y = acc * s_ref[...] + t_ref[...]
    if relu:
        y = jnp.maximum(y, 0.0)
    o_ref[...] = y


@functools.partial(jax.jit, static_argnames=("relu",))
def linear_bn_act(x, w_t, scale, shift, *, relu=False):
    """x: (N, K), w_t: (K, Dout), scale/shift: (1, Dout); K, Dout multiples of 128."""
    n, k = x.shape
    k2, dout = w_t.shape
    assert k == k2 and k % 128 == 0 and dout % 128 == 0

    tn = min(TILE_ROWS, _ru(max(n, 1), 8))
    n_pad = _ru(n, tn)
    x_p = jnp.pad(x, ((0, n_pad - n), (0, 0)))

    cost = pl.CostEstimate(
        flops=2 * n_pad * k * dout + 2 * n_pad * dout,
        transcendentals=0,
        bytes_accessed=4 * (n_pad * k + k * dout + 2 * dout + n_pad * dout))

    out = pl.pallas_call(
        functools.partial(_linear_bn_act_kernel, relu=relu),
        out_shape=jax.ShapeDtypeStruct((n_pad, dout), jnp.float32),
        grid_spec=pltpu.PrefetchScalarGridSpec(
            num_scalar_prefetch=0,
            grid=(n_pad // tn,),
            in_specs=[pl.BlockSpec((tn, k), lambda i: (i, 0)),
                      pl.BlockSpec((k, dout), lambda i: (0, 0)),      # resident weight
                      pl.BlockSpec((1, dout), lambda i: (0, 0)),
                      pl.BlockSpec((1, dout), lambda i: (0, 0))],
            out_specs=pl.BlockSpec((tn, dout), lambda i: (i, 0))),
        compiler_params=pltpu.CompilerParams(dimension_semantics=("parallel",)),
        cost_estimate=cost,
    )(x_p, w_t, scale.astype(jnp.float32), shift.astype(jnp.float32))
    return out[:n]


# ----------------------------------------------------------------------------------
# Parameters
# ----------------------------------------------------------------------------------
def _xavier_uniform(key, shape):
    fan_out, fan_in = shape[0], shape[1]
    bound = (6.0 / (fan_in + fan_out)) ** 0.5
    return jax.random.uniform(key, shape, jnp.float32, -bound, bound)


def _fold_bn_affine(gamma, beta, mean, var, bias, out_pad):
    """BN_eval(z + bias) == z * s + t; padded channels get s=1, t=0 (stay exactly zero)."""
    s = gamma / jnp.sqrt(var + BN_EPS)
    t = (bias - mean) * s + beta
    d = s.shape[0]
    s = jnp.pad(s, (0, out_pad - d), constant_values=1.0)
    t = jnp.pad(t, (0, out_pad - d), constant_values=0.0)
    return s.reshape(1, out_pad), t.reshape(1, out_pad)


def init_gnn_node_params(key, num_layer, emb_dim):
    if num_layer < 2:
        raise ValueError("Number of GNN layers must be greater than 1.")
    D, H = emb_dim, 2 * emb_dim
    Dp, Hp = _ru(D, 128), _ru(H, 128)
    layers = []
    for lk in jax.random.split(key, num_layer):
        ks = jax.random.split(lk, 16)
        # MixedBondEncoder weight (D, 9): the two column-blocks are xavier'd separately.
        bond_w = jnp.concatenate([_xavier_uniform(ks[0], (D, NUM_BOND_TYPE)),
                                  _xavier_uniform(ks[1], (D, NUM_BOND_DIRECTION))], axis=1)
        bond_w_t_pad = jnp.zeros((F_PAD, Dp), jnp.float32).at[:BOND_FEATS, :D].set(bond_w.T)
        # GIN MLP: Linear(D,2D) -> BN(2D) -> ReLU -> Linear(2D,D); outer BN(D); eps=0.
        w1 = jax.random.uniform(ks[2], (H, D), jnp.float32, -1.0, 1.0) / jnp.sqrt(D)
        b1 = jax.random.uniform(ks[3], (H,), jnp.float32, -1.0, 1.0) / jnp.sqrt(D)
        w2 = jax.random.uniform(ks[4], (D, H), jnp.float32, -1.0, 1.0) / jnp.sqrt(H)
        b2 = jax.random.uniform(ks[5], (D,), jnp.float32, -1.0, 1.0) / jnp.sqrt(H)
        bn1_gamma = jax.random.uniform(ks[6], (H,), jnp.float32, 0.5, 1.5)
        bn1_beta = 0.1 * jax.random.normal(ks[7], (H,), jnp.float32)
        bn1_mean = 0.1 * jax.random.normal(ks[8], (H,), jnp.float32)
        bn1_var = jax.random.uniform(ks[9], (H,), jnp.float32, 0.5, 1.5)
        bno_gamma = jax.random.uniform(ks[10], (D,), jnp.float32, 0.5, 1.5)
        bno_beta = 0.1 * jax.random.normal(ks[11], (D,), jnp.float32)
        bno_mean = 0.1 * jax.random.normal(ks[12], (D,), jnp.float32)
        bno_var = jax.random.uniform(ks[13], (D,), jnp.float32, 0.5, 1.5)
        # Pre-transposed, zero-padded weights (lane-dense, resident in VMEM during the grid).
        w1_t_pad = jnp.zeros((Dp, Hp), jnp.float32).at[:D, :H].set(w1.T)
        w2_t_pad = jnp.zeros((Hp, Dp), jnp.float32).at[:H, :D].set(w2.T)
        s1, t1 = _fold_bn_affine(bn1_gamma, bn1_beta, bn1_mean, bn1_var, b1, Hp)
        s_out, t_out = _fold_bn_affine(bno_gamma, bno_beta, bno_mean, bno_var, b2, Dp)
        layers.append(dict(
            eps=jnp.float32(0.0), bond_w=bond_w, bond_w_t_pad=bond_w_t_pad,
            w1=w1, b1=b1, w2=w2, b2=b2,
            bn1_gamma=bn1_gamma, bn1_beta=bn1_beta, bn1_mean=bn1_mean, bn1_var=bn1_var,
            bno_gamma=bno_gamma, bno_beta=bno_beta, bno_mean=bno_mean, bno_var=bno_var,
            w1_t_pad=w1_t_pad, w2_t_pad=w2_t_pad, s1=s1, t1=t1, s_out=s_out, t_out=t_out))
    return {"emb_dim": emb_dim, "num_layer": num_layer, "layers": layers}


# ----------------------------------------------------------------------------------
# GNN_node forward (Pallas-backed, inference semantics)
# ----------------------------------------------------------------------------------
def gnn_node_forward(params, x, edge_index, edge_attr, *, edge_weight=None,
                     perturb=None, JK="last", residual=False, drop_ratio=0.5):
    # TODO(synk): training-mode dropout and BatchNorm batch statistics are not implemented
    #             (inference semantics: dropout = identity, BN uses running stats).
    del drop_ratio
    D = params["emb_dim"]
    Dp = _ru(D, 128)
    num_layer = params["num_layer"]
    src = edge_index[0].astype(jnp.int32)
    dst = edge_index[1].astype(jnp.int32)

    # node_encoder is external in GNN_node; node_encoder=None path -> encoded_node = x.
    h = x.astype(jnp.float32)
    if perturb is not None:
        h = h + perturb.astype(jnp.float32)
    h = jnp.pad(h, ((0, 0), (0, Dp - D)))        # lane-dense padded feature slab, kept all layers

    h_list = [h]
    for layer in range(num_layer):
        lp = params["layers"][layer]
        x_cur = h_list[layer]

        # ---- GINConv ----
        # TODO(synk): data-dependent gather/scatter-add have no clean dense Pallas equivalent;
        #             left to XLA (jnp.take / .at[].add).
        x_src = jnp.take(x_cur, src, axis=0)                              # (E, Dp)
        if edge_weight is not None:
            x_src = x_src * edge_weight.astype(jnp.float32)[:, None]
        msg = bond_message_relu(lp["bond_w_t_pad"], x_src, edge_attr)     # Pallas fused kernel
        agg = ((1.0 + lp["eps"]) * x_cur).at[dst].add(msg)                # (1+eps)*x + sum(msg)

        # GIN MLP (BN folded) + outer BN, Pallas fused linear kernels
        h1 = linear_bn_act(agg, lp["w1_t_pad"], lp["s1"], lp["t1"], relu=True)
        is_last = layer == num_layer - 1
        h2 = linear_bn_act(h1, lp["w2_t_pad"], lp["s_out"], lp["t_out"], relu=not is_last)

        # dropout: identity at inference
        if residual:
            h2 = h2 + x_cur
        h_list.append(h2)

    if JK == "last":
        return h_list[-1][:, :D]
    elif JK == "sum":
        return sum(h_list)[:, :D]
    elif JK == "cat":
        return jnp.concatenate([h_list[0][:, :D], h_list[-1][:, :D]], axis=-1)
    else:
        raise ValueError(f"Unknown JK mode {JK}")


# ----------------------------------------------------------------------------------
# Pure-JAX reference (no Pallas) for validation
# ----------------------------------------------------------------------------------
def gnn_node_reference(params, x, edge_index, edge_attr, *, edge_weight=None,
                       perturb=None, JK="last", residual=False):
    HP = jax.lax.Precision.HIGHEST
    D = params["emb_dim"]
    src, dst = edge_index[0], edge_index[1]

    def bn(z, g, b, m, v):
        return (z - m) / jnp.sqrt(v + BN_EPS) * g + b

    h = x.astype(jnp.float32)
    if perturb is not None:
        h = h + perturb.astype(jnp.float32)
    h_list = [h]
    for layer in range(params["num_layer"]):
        lp = params["layers"][layer]
        x_cur = h_list[layer]
        if edge_attr.shape[1] == 2:
            embT = lp["bond_w"].T
            e_emb = embT[:NUM_BOND_TYPE][edge_attr[:, 0]] + embT[NUM_BOND_TYPE:][edge_attr[:, 1]]
        else:
            e_emb = jnp.dot(edge_attr.astype(jnp.float32), lp["bond_w"].T, precision=HP)
        xj = x_cur[src]
        if edge_weight is not None:
            xj = xj * edge_weight.astype(jnp.float32)[:, None]
        msg = jax.nn.relu(xj + e_emb)
        agg = jnp.zeros_like(x_cur).at[dst].add(msg)
        hin = (1.0 + lp["eps"]) * x_cur + agg
        z1 = jnp.dot(hin, lp["w1"].T, precision=HP) + lp["b1"]
        z1 = jax.nn.relu(bn(z1, lp["bn1_gamma"], lp["bn1_beta"], lp["bn1_mean"], lp["bn1_var"]))
        z2 = jnp.dot(z1, lp["w2"].T, precision=HP) + lp["b2"]
        z2 = bn(z2, lp["bno_gamma"], lp["bno_beta"], lp["bno_mean"], lp["bno_var"])
        if layer != params["num_layer"] - 1:
            z2 = jax.nn.relu(z2)
        if residual:
            z2 = z2 + x_cur
        h_list.append(z2)
    if JK == "last":
        return h_list[-1]
    elif JK == "sum":
        return sum(h_list)
    elif JK == "cat":
        return jnp.concatenate([h_list[0], h_list[-1]], axis=-1)
    else:
        raise ValueError(f"Unknown JK mode {JK}")


if __name__ == "__main__":
    key = jax.random.PRNGKey(0)
    kp, kx, ksrc, kdst, ktyp, kdir, kdense = jax.random.split(key, 7)

    emb_dim = 32
    num_layer = 2
    n_nodes = 12
    n_edges = 24

    params = init_gnn_node_params(kp, num_layer, emb_dim)
    x = jax.random.normal(kx, (n_nodes, emb_dim), jnp.float32)
    edge_index = jnp.stack(
        [jax.random.randint(ksrc, (n_edges,), 0, n_nodes, jnp.int32),
         jax.random.randint(kdst, (n_edges,), 0, n_nodes, jnp.int32)], axis=0)

    # --- branch 1: integer (bond_type, bond_direction) index pairs (F.embedding path) ---
    edge_attr_idx = jnp.concatenate(
        [jax.random.randint(ktyp, (n_edges, 1), 0, NUM_BOND_TYPE, jnp.int32),
         jax.random.randint(kdir, (n_edges, 1), 0, NUM_BOND_DIRECTION, jnp.int32)], axis=1)
    out_idx = gnn_node_forward(params, x, edge_index, edge_attr_idx)
    jax.block_until_ready(out_idx)
    ref_idx = gnn_node_reference(params, x, edge_index, edge_attr_idx)
    assert out_idx.shape == (n_nodes, emb_dim)
    err_idx = float(jnp.max(jnp.abs(out_idx - ref_idx)))
    assert jnp.allclose(out_idx, ref_idx, atol=5e-3, rtol=5e-3), f"idx branch max err {err_idx}"

    # --- branch 2: dense float edge features (nn.Linear path of MixedBondEncoder) ---
    edge_attr_dense = jax.random.normal(kdense, (n_edges, BOND_FEATS), jnp.float32)
    out_dense = gnn_node_forward(params, x, edge_index, edge_attr_dense)
    jax.block_until_ready(out_dense)
    ref_dense = gnn_node_reference(params, x, edge_index, edge_attr_dense)
    err_dense = float(jnp.max(jnp.abs(out_dense - ref_dense)))
    assert jnp.allclose(out_dense, ref_dense, atol=5e-3, rtol=5e-3), f"dense branch max err {err_dense}"

    print("KERNEL_OK")
</pallas_src>

<mosaic_0001>
module attributes {stable_mosaic.version = 11 : i64} {
  func.func @_bond_msg_idx_kernel(%arg0: i32, %arg1: memref<24x2xi32, #tpu.memory_space<vmem>>, %arg2: memref<24x128xf32, #tpu.memory_space<vmem>>, %arg3: memref<16x128xf32, #tpu.memory_space<vmem>>, %arg4: memref<24x128xf32, #tpu.memory_space<vmem>>) attributes {dimension_semantics = [#tpu.dimension_semantics<parallel>], iteration_bounds = array<i64: 1>, scalar_prefetch = 0 : i64, scratch_operands = 0 : i64, tpu.core_type = #tpu.core_type<tc>, window_params = [{transform_indices = @transform_0, window_bounds = array<i64: 24, 2>}, {transform_indices = @transform_1, window_bounds = array<i64: 24, 128>}, {pipeline_mode = #tpu.pipeline_mode<synchronous>, transform_indices = @transform_2, window_bounds = array<i64: 16, 128>}, {transform_indices = @transform_3, window_bounds = array<i64: 24, 128>}]} {
    %c0 = arith.constant 0 : index
    %c0_0 = arith.constant 0 : index
    %0 = vector.load %arg1[%c0, %c0_0] : memref<24x2xi32, #tpu.memory_space<vmem>>, vector<24x2xi32>
    %1 = vector.extract_strided_slice %0 {offsets = [0, 0], sizes = [24, 1], strides = [1, 1]} : vector<24x2xi32> to vector<24x1xi32>
    %2 = vector.extract_strided_slice %0 {offsets = [0, 1], sizes = [24, 1], strides = [1, 1]} : vector<24x2xi32> to vector<24x1xi32>
    %c6_i32 = arith.constant 6 : i32
    %3 = vector.broadcast %c6_i32 : i32 to vector<24x1xi32>
    %4 = arith.addi %2, %3 : vector<24x1xi32>
    %5 = tpu.iota {dimensions = array<i32: 1>} : vector<24x16xi32>
    %6 = vector.broadcast %1 : vector<24x1xi32> to vector<24x16xi32>
    %7 = arith.cmpi eq, %5, %6 : vector<24x16xi32>
    %8 = arith.extui %7 : vector<24x16xi1> to vector<24x16xi32>
    %9 = arith.sitofp %8 : vector<24x16xi32> to vector<24x16xf32>
    %10 = vector.broadcast %4 : vector<24x1xi32> to vector<24x16xi32>
    %11 = arith.cmpi eq, %5, %10 : vector<24x16xi32>
    %12 = arith.extui %11 : vector<24x16xi1> to vector<24x16xi32>
    %13 = arith.sitofp %12 : vector<24x16xi32> to vector<24x16xf32>
    %14 = arith.addf %9, %13 : vector<24x16xf32>
    %c0_1 = arith.constant 0 : index
    %c0_2 = arith.constant 0 : index
    %15 = vector.load %arg3[%c0_1, %c0_2] : memref<16x128xf32, #tpu.memory_space<vmem>>, vector<16x128xf32>
    %cst = arith.constant dense<0.000000e+00> : vector<24x128xf32>
    %16 = tpu.matmul %14, %15, %cst {dimension_numbers = #tpu.dot_dimension_numbers<[1], [0], [0], [1], [0, 0, 1, 1], [], []>} : vector<24x16xf32>, vector<16x128xf32>, vector<24x128xf32> -> vector<24x128xf32>
    %c0_3 = arith.constant 0 : index
    %c0_4 = arith.constant 0 : index
    %17 = vector.load %arg2[%c0_3, %c0_4] : memref<24x128xf32, #tpu.memory_space<vmem>>, vector<24x128xf32>
    %18 = arith.addf %17, %16 : vector<24x128xf32>
    %cst_5 = arith.constant 0.000000e+00 : f32
    %19 = vector.broadcast %cst_5 : f32 to vector<24x128xf32>
    %20 = arith.maximumf %18, %19 : vector<24x128xf32>
    %c0_6 = arith.constant 0 : index
    %c0_7 = arith.constant 0 : index
    %21 = vector.load %arg4[%c0_6, %c0_7] : memref<24x128xf32, #tpu.memory_space<vmem>>, vector<24x128xf32>
    tpu.vector_store %arg4[%c0_6, %c0_7], %20 {strides = array<i32>} : memref<24x128xf32, #tpu.memory_space<vmem>>, vector<24x128xf32>,
    return
  }
  func.func @transform_0(%arg0: i32) -> (i32, i32) {
    %c0_i32 = arith.constant 0 : i32
    %c0_i32_0 = arith.constant 0 : i32
    return %arg0, %c0_i32 : i32, i32
  }
  func.func @transform_1(%arg0: i32) -> (i32, i32) {
    %c0_i32 = arith.constant 0 : i32
    %c0_i32_0 = arith.constant 0 : i32
    return %arg0, %c0_i32 : i32, i32
  }
  func.func @transform_2(%arg0: i32) -> (i32, i32) {
    %c0_i32 = arith.constant 0 : i32
    %c0_i32_0 = arith.constant 0 : i32
    %c0_i32_1 = arith.constant 0 : i32
    return %c0_i32, %c0_i32_0 : i32, i32
  }
  func.func @transform_3(%arg0: i32) -> (i32, i32) {
    %c0_i32 = arith.constant 0 : i32
    %c0_i32_0 = arith.constant 0 : i32
    return %arg0, %c0_i32 : i32, i32
  }
}

</mosaic_0001>

<llo_original>
// kernel: bond_message_relu.1
$region0: #{bond_message_relu.1}
  #allocation0 [shape = 'u32[]', space=smem, size = 0x4, offset = 0x4, fixed_abs, tag = 'smem constant byte address 0x4 - core index']
  #allocation1 [shape = 'u32[144,128]{1,0:T(1,128)}', space=vmem, size = 0x12000, scoped, tag = 'internal scratch']
  %s0 = inlined_call_operand.vmem [shape: s32[24,2], index: 0, kind: input, shape index: {}]
  %s1 = inlined_call_operand.vmem [shape: f32[24,128], index: 1, kind: input, shape index: {}]
  %s2 = inlined_call_operand.hbm [shape: f32[16,128], index: 2, kind: input, shape index: {}]
  %s3 = inlined_call_operand.hbm [shape: f32[24,128], index: 3, kind: output, shape index: {}]
  %s4 = sld [smem:[#allocation0]]
  $region26: #{bond_message_relu.1} parent=0
    _
  %s6 = ssub.s32 1, %s4
  %s7 = scalar_select 0, %s6, %s4
  $region1: #{bond_message_relu.1} parent=0
    #allocation2 [shape = 'u8[8192]{0}', space=vmem, size = 0x2000, scoped, tag = 'input window, operand 2, single buffered']
    #allocation3 [shape = 's32[1]{0}', space=sflag, size = 0x4, scoped, tag = 'scoped memory for bond_message_relu.1']
    #allocation4 [shape = 's32[1]{0}', space=sflag, size = 0x4, scoped, tag = 'scoped memory for bond_message_relu.1']
    #allocation5 [shape = 'u8[12288]{0}', space=vmem, size = 0x3000, scoped, tag = 'output window, operand 0, single buffered']
    %8 = vsyncpa [#allocation3], 0
    %9 = vsyncpa [#allocation4], 0
    // Predicated region
    $region2: #{bond_message_relu.1} parent=1 // pred_check
      _
    $region3: #{bond_message_relu.1} parent=1 // pred_check_branch
      %11 = sbr.rel (0) target = $region5
    $region4: #{bond_message_relu.1} parent=1 // pred_region
      _
    $region5: #{bond_message_relu.1} parent=1 // pred_fallthru
      _
    // Predicated region
    $region6: #{bond_message_relu.1} parent=1 // pred_check
      _
    $region7: #{bond_message_relu.1} parent=1 // pred_check_branch
      %13 = sbr.rel (0) target = $region9
    $region8: #{bond_message_relu.1} parent=1 // pred_region
      _
    $region9: #{bond_message_relu.1} parent=1 // pred_fallthru
      _
    // Predicated region
    $region10: #{bond_message_relu.1} parent=1 // pred_check
      _
    $region11: #{bond_message_relu.1} parent=1 // pred_check_branch
      %15 = sbr.rel (0) target = $region13
    $region12: #{bond_message_relu.1} parent=1 // pred_region
      %s17 = ssub.s32 256, 256
      %18 = vsyncadd [#allocation3], %s17
      %s19 = sshll.u32 [#allocation2], 4
      %s20 = int_to_ptr.vmem [resolvable:$true] %s19
      %25 = dma.hbm_to_vmem [thread:$0]  %s2, 256, %s20, [#allocation3], 128, 128, 8
    $region13: #{bond_message_relu.1} parent=1 // pred_fallthru
      _
    // Predicated region
    $region14: #{bond_message_relu.1} parent=1 // pred_check
      _
    $region15: #{bond_message_relu.1} parent=1 // pred_check_branch
      %27 = sbr.rel (0) target = $region17
    $region16: #{bond_message_relu.1} parent=1 // pred_region
      %28 = dma.done [#allocation3], 256
    $region17: #{bond_message_relu.1} parent=1 // pred_fallthru
      _
    %v29 = vld [vmem:[%s0] sm:$0xff]
    %v30 = vld [vmem:[%s0 + $0x8] sm:$0xff]
    %v31 = vld [vmem:[%s0 + $0x10] sm:$0xff]
    %v32 = vadd.s32 %v29, 6
    %v33 = vadd.s32 %v30, 6
    %v34 = vadd.s32 %v31, 6
    %v35 = vlaneseq
    %v36 = vand.u32 %v35, 127
    %37 = vset.pattern.permute.xlu0 0
    %38 = vperm.xlu0 %37, %v29
    %v39 = vpop.permute.xlu0 %38
    %40 = vset.pattern.permute.xlu0 0
    %41 = vperm.xlu0 %40, %v30
    %v42 = vpop.permute.xlu0 %41
    %43 = vset.pattern.permute.xlu0 0
    %44 = vperm.xlu0 %43, %v31
    %v45 = vpop.permute.xlu0 %44
    %vm46 = vcmp.eq.s32.totalorder %v36, %v39
    %vm47 = vcmp.eq.s32.totalorder %v36, %v42
    %vm48 = vcmp.eq.s32.totalorder %v36, %v45
    %v49 = vsel %vm46, 1, 0
    %v50 = vsel %vm47, 1, 0
    %v51 = vsel %vm48, 1, 0
    %v52 = vcvt.s32.f32 %v49
    %v53 = vcvt.s32.f32 %v50
    %v54 = vcvt.s32.f32 %v51
    %55 = vset.pattern.permute.xlu0 1
    %56 = vperm.xlu0 %55, %v32
    %v57 = vpop.permute.xlu0 %56
    %58 = vset.pattern.permute.xlu0 1
    %59 = vperm.xlu0 %58, %v33
    %v60 = vpop.permute.xlu0 %59
    %61 = vset.pattern.permute.xlu0 1
    %62 = vperm.xlu0 %61, %v34
    %v63 = vpop.permute.xlu0 %62
    %vm64 = vcmp.eq.s32.totalorder %v36, %v57
    %vm65 = vcmp.eq.s32.totalorder %v36, %v60
    %vm66 = vcmp.eq.s32.totalorder %v36, %v63
    %v67 = vsel %vm64, 1, 0
    %v68 = vsel %vm65, 1, 0
    %v69 = vsel %vm66, 1, 0
    %v70 = vcvt.s32.f32 %v67
    %v71 = vcvt.s32.f32 %v68
    %v72 = vcvt.s32.f32 %v69
    %v73 = vadd.f32 %v52, %v70
    %v74 = vadd.f32 %v53, %v71
    %v75 = vadd.f32 %v54, %v72
    %v76 = vld [vmem:[#allocation2] sm:$0xff]
    %v77 = vld [vmem:[#allocation2 + $0x8] sm:$0xff]
    %vm78 = vcmask 130048
    %v80 = vsel %vm78, %v73, 0
    %v83 = vsel %vm78, %v74, 0
    %v86 = vsel %vm78, %v75, 0
    %88 = vmatprep.subr.mxu0 0.0
    %89 = vmatpush1.msra.mxu0 0.0
    %90 = vmatprep.subr.mxu0 0.0
    %91 = vmatpush1.msra.mxu0 0.0
    %92 = vmatprep.subr.mxu0 0.0
    %93 = vmatpush1.msra.mxu0 0.0
    %94 = vmatprep.subr.mxu0 0.0
    %95 = vmatpush1.msra.mxu0 0.0
    %96 = vmatprep.subr.mxu0 0.0
    %97 = vmatpush1.msra.mxu0 0.0
    %98 = vmatprep.subr.mxu0 0.0
    %99 = vmatpush1.msra.mxu0 0.0
    %100 = vmatprep.subr.mxu0 0.0
    %101 = vmatpush1.msra.mxu0 0.0
    %102 = vmatprep.subr.mxu0 0.0
    %103 = vmatpush1.msra.mxu0 0.0
    %104 = vmatprep.subr.mxu0 0.0
    %105 = vmatpush1.msra.mxu0 0.0
    %106 = vmatprep.subr.mxu0 0.0
    %107 = vmatpush1.msra.mxu0 0.0
    %108 = vmatprep.subr.mxu0 0.0
    %109 = vmatpush1.msra.mxu0 0.0
    %110 = vmatprep.subr.mxu0 0.0
    %111 = vmatpush1.msra.mxu0 0.0
    %112 = vmatprep.subr.mxu0 0.0
    %113 = vmatpush1.msra.mxu0 0.0
    %114 = vmatprep.subr.mxu0 0.0
    %115 = vmatpush1.msra.mxu0 0.0
    %116 = vmatprep.subr.mxu0 0.0
    %117 = vmatpush1.msra.mxu0 %v77
    %118 = vmatprep.subr.mxu0 0.0
    %119 = vmatpush1.msra.mxu0 %v76
    %120 = vmatprep.subr.mxu0 0.0
    %121 = vmatpush2.msra.mxu0 0.0
    %122 = vmatprep.subr.mxu0 0.0
    %123 = vmatpush2.msra.mxu0 0.0
    %124 = vmatprep.subr.mxu0 0.0
    %125 = vmatpush2.msra.mxu0 0.0
    %126 = vmatprep.subr.mxu0 0.0
    %127 = vmatpush2.msra.mxu0 0.0
    %128 = vmatprep.subr.mxu0 0.0
    %129 = vmatpush2.msra.mxu0 0.0
    %130 = vmatprep.subr.mxu0 0.0
    %131 = vmatpush2.msra.mxu0 0.0
    %132 = vmatprep.subr.mxu0 0.0
    %133 = vmatpush2.msra.mxu0 0.0
    %134 = vmatprep.subr.mxu0 0.0
    %135 = vmatpush2.msra.mxu0 0.0
    %136 = vmatprep.subr.mxu0 0.0
    %137 = vmatpush2.msra.mxu0 0.0
    %138 = vmatprep.subr.mxu0 0.0
    %139 = vmatpush2.msra.mxu0 0.0
    %140 = vmatprep.subr.mxu0 0.0
    %141 = vmatpush2.msra.mxu0 0.0
    %142 = vmatprep.subr.mxu0 0.0
    %143 = vmatpush2.msra.mxu0 0.0
    %144 = vmatprep.subr.mxu0 0.0
    %145 = vmatpush2.msra.mxu0 0.0
    %146 = vmatprep.subr.mxu0 0.0
    %147 = vmatpush2.msra.mxu0 0.0
    %148 = vmatprep.subr.mxu0 0.0
    %149 = vmatpush2.msra.mxu0 0.0
    %150 = vmatprep.subr.mxu0 0.0
    %151 = vmatpush2.msra.mxu0 0.0
    %152 = vmatprep.mubr.f32.mxu0 0.0
    %153 = vmatmul.mubr.f32.gmra.mxu0 %v80
    %v154 = vpop.f32.mrf.mxu0
    %v155 = vadd.f32 0.0, %v154
    %v156 = vpop.f32.mrf.mxu0
    %157 = vmatprep.mubr.f32.mxu0 0.0
    %158 = vmatmul.mubr.f32.gmra.mxu0 %v83
    %v159 = vpop.f32.mrf.mxu0
    %v160 = vadd.f32 0.0, %v159
    %v161 = vpop.f32.mrf.mxu0
    %162 = vmatprep.mubr.f32.mxu0 0.0
    %163 = vmatmul.mubr.f32.gmra.mxu0 %v86
    %v164 = vpop.f32.mrf.mxu0
    %v165 = vadd.f32 0.0, %v164
    %v166 = vpop.f32.mrf.mxu0
    %167 = vdwg.mxu0
    %v168 = vld [vmem:[%s1] sm:$0xff]
    %v169 = vld [vmem:[%s1 + $0x8] sm:$0xff]
    %v170 = vld [vmem:[%s1 + $0x10] sm:$0xff]
    %v171 = vadd.f32 %v168, %v155
    %v172 = vadd.f32 %v169, %v160
    %v173 = vadd.f32 %v170, %v165
    %v174 = vmax.f32 %v171, 0.0
    %v175 = vmax.f32 %v172, 0.0
    %v176 = vmax.f32 %v173, 0.0
    %177 = vst [vmem:[#allocation5] sm:$0xff] %v174
    %178 = vst [vmem:[#allocation5 + $0x8] sm:$0xff] %v175
    %179 = vst [vmem:[#allocation5 + $0x10] sm:$0xff] %v176
    // Predicated region
    $region18: #{bond_message_relu.1} parent=1 // pred_check
      _
    $region19: #{bond_message_relu.1} parent=1 // pred_check_branch
      %181 = sbr.rel (0) target = $region21
    $region20: #{bond_message_relu.1} parent=1 // pred_region
      %s183 = ssub.s32 384, 384
      %184 = vsyncadd [#allocation4], %s183
      %s185 = sshll.u32 [#allocation5], 4
      %s186 = int_to_ptr.vmem [resolvable:$true] %s185
      %191 = dma.vmem_to_hbm [thread:$0]  %s186, 384, %s3, [#allocation4], 128, 128, 8
    $region21: #{bond_message_relu.1} parent=1 // pred_fallthru
      _
    // Predicated region
    $region22: #{bond_message_relu.1} parent=1 // pred_check
      _
    $region23: #{bond_message_relu.1} parent=1 // pred_check_branch
      %193 = sbr.rel (0) target = $region25
    $region24: #{bond_message_relu.1} parent=1 // pred_region
      %194 = dma.done [#allocation4], 384
    $region25: #{bond_message_relu.1} parent=1 // pred_fallthru
      _
    %195 = vsyncpa [#allocation3], 1
    %196 = vsyncpa [#allocation4], 1

</llo_original>
